<compile_context>
chip_gen: v6e
topology: v6e:2x2x1
jax: 0.10.0
libtpu: 0.0.40
codegen_flags: <defaults>
</compile_context>

<pallas_src>
import functools

import jax
import jax.numpy as jnp
from jax import lax
from jax.experimental import pallas as pl
from jax.experimental.pallas import tpu as pltpu

CONV_CHANNELS = 128
ITERATIONS = 40  # loop body is invariant in its input -> one pass == 40 passes


def dcsc_opt_kernel(xk_ref, w_ref, o_ref):
    """ReLU(x + conv3x3_same(x, w)) for one batch block.

    xk_ref: (Nb, H+2, W, 3C)  kx-folded, H-padded NHWC f32 slab (VMEM).
                              Lane block k (width C) holds x_pad[n, h, w+k, :].
    w_ref : (9C, C)           folded weight, row index = (ky*3 + kx)*C + cin,
                              dtype = matmul compute dtype (bf16 or f32).
    o_ref : (Nb, H, W, C)
    """
    Nb, Hp, W, C3 = xk_ref.shape
    H = Hp - 2
    C = C3 // 3
    M = Nb * H * W

    xk = xk_ref[...]

    # Fold the 3 ky taps into the lane (K) dimension as well: the H slices are
    # whole-(W, 3C)-tile selections (free) and the lane concat is aligned vreg
    # copies at offsets 0 / 3C / 6C.  One (M, 9C) @ (9C, C) MXU matmul.
    xkc = xk.astype(w_ref.dtype)
    patch = jnp.concatenate(
        [xkc[:, 0:H], xkc[:, 1:H + 1], xkc[:, 2:Hp]], axis=-1)
    patch = patch.reshape(M, 3 * C3)

    acc = jnp.dot(patch, w_ref[...], preferred_element_type=jnp.float32)

    # Unshifted input = ky=1 rows, kx=1 lane block (offset C, aligned).  Read
    # from the f32 slab so the residual add + ReLU are exact regardless of the
    # matmul compute dtype.
    x_center = xk[:, 1:H + 1, :, C:2 * C].reshape(M, C).astype(jnp.float32)
    out = jnp.maximum(x_center + acc, 0.0)
    o_ref[...] = out.reshape(Nb, H, W, C).astype(o_ref.dtype)


def prepare_weight(w_oihw, compute_dtype=jnp.bfloat16):
    """One-time fold: OIHW (Cout, Cin, 3, 3) -> (9*Cin, Cout).

    Row index = (ky*3 + kx)*Cin + cin, matching the kernel's patch lane order.
    """
    w_hwio = jnp.transpose(w_oihw, (2, 3, 1, 0))        # (ky, kx, Cin, Cout)
    kh, kw, cin, cout = w_hwio.shape
    return w_hwio.reshape(kh * kw * cin, cout).astype(compute_dtype)


@functools.partial(jax.jit, static_argnames=("grid_n",))
def optimization_forward_nhwc(x_nhwc, w_folded, *, grid_n=1):
    """NHWC forward.  `w_folded` comes from prepare_weight (constant, hoisted).

    grid_n: batch split across grid steps.  Only useful on v7x (2 TensorCores)
    and only when each core's block keeps Nb*H*W >= 256; on v5e/v6e the grid
    is a serial loop, so keep grid_n=1 (default).
    """
    N, H, W, C = x_nhwc.shape
    assert C == CONV_CHANNELS, "module fixes conv_channels = 128"
    assert W % 8 == 0, "W must be a multiple of 8 (sublane tile) for free reshapes"
    assert N % grid_n == 0
    Nb = N // grid_n

    # 'same' zero padding + kx fold applied once here; XLA fuses them, and the
    # kernel's input DMA sees an already lane-dense (Nb, H+2, W, 3C) slab with
    # a tile-aligned sublane (W) dimension -- no unaligned sublane slices or
    # relayouts inside the kernel.
    xp = jnp.pad(x_nhwc, ((0, 0), (1, 1), (1, 1), (0, 0)))
    xk = jnp.concatenate(
        [xp[:, :, 0:W, :], xp[:, :, 1:W + 1, :], xp[:, :, 2:W + 2, :]], axis=-1)

    # Per-step VMEM estimate: double-buffered in/out blocks + weight + the
    # in-kernel (M, 9C) patch.  Tiny at the test shape; guard against silently
    # outgrowing v5e's 16 MiB / v7x's 32 MiB scoped VMEM defaults.
    itemsize = x_nhwc.dtype.itemsize
    in_bytes = Nb * (H + 2) * W * 3 * C * itemsize
    out_bytes = Nb * H * W * C * itemsize
    w_bytes = 9 * C * C * w_folded.dtype.itemsize
    patch_bytes = Nb * H * W * 9 * C * w_folded.dtype.itemsize
    vmem_est = 2 * (in_bytes + out_bytes) + w_bytes + patch_bytes
    # TODO(synk): for large H*W, add an H-tile grid axis with a 1-row halo (or
    # raise vmem_limit_bytes) instead of this assert.
    assert vmem_est < 12 * 1024 * 1024, "block too large for scoped VMEM; H-tile it"

    cost = pl.CostEstimate(
        flops=2 * N * H * W * 9 * C * C,
        transcendentals=0,
        bytes_accessed=(N * (H + 2) * W * 3 * C * itemsize
                        + w_bytes
                        + N * H * W * C * itemsize))

    return pl.pallas_call(
        dcsc_opt_kernel,
        out_shape=jax.ShapeDtypeStruct((N, H, W, C), x_nhwc.dtype),
        grid=(grid_n,),
        in_specs=[
            pl.BlockSpec((Nb, H + 2, W, 3 * C), lambda i: (i, 0, 0, 0)),
            # Weight is constant across the grid; with grid_n == 1 (default)
            # there is a single step.
            pl.BlockSpec((9 * C, C), lambda i: (0, 0)),
        ],
        out_specs=pl.BlockSpec((Nb, H, W, C), lambda i: (i, 0, 0, 0)),
        compiler_params=pltpu.CompilerParams(
            dimension_semantics=("parallel",)),
        cost_estimate=cost,
    )(xk, w_folded)


@functools.partial(jax.jit, static_argnames=("grid_n", "compute_dtype"))
def optimization_forward(x_nchw, w_oihw, *, grid_n=1, compute_dtype=jnp.bfloat16):
    """PyTorch-layout convenience wrapper (NCHW in/out, OIHW weight).

    Hot-path callers should use optimization_forward_nhwc with a pre-folded
    weight; this wrapper at least jits the NCHW<->NHWC transposes together
    with the pad/concat and the kernel call so XLA can fuse/schedule them.
    """
    x_nhwc = jnp.transpose(x_nchw, (0, 2, 3, 1))
    w_folded = prepare_weight(w_oihw, compute_dtype)
    out = optimization_forward_nhwc(x_nhwc, w_folded, grid_n=grid_n)
    return jnp.transpose(out, (0, 3, 1, 2))


def reference_forward(x_nchw, w_oihw):
    """Plain-JAX reference mirroring the PyTorch module (f32)."""
    y = lax.conv_general_dilated(
        x_nchw, w_oihw, window_strides=(1, 1), padding="SAME",
        dimension_numbers=("NCHW", "OIHW", "NCHW"))
    return jnp.maximum(x_nchw + y, 0.0)


if __name__ == "__main__":
    key = jax.random.PRNGKey(0)
    kx_key, kw_key = jax.random.split(key)

    N, C, H, W = 2, CONV_CHANNELS, 8, 8          # module fixes C = 128
    x = jax.random.normal(kx_key, (N, C, H, W), dtype=jnp.float32)

    # Deterministic conv weight, PyTorch layout (Cout, Cin, kh, kw), no bias.
    fan_in = C * 3 * 3
    w = jax.random.normal(kw_key, (C, C, 3, 3), dtype=jnp.float32) / jnp.sqrt(fan_in)

    ref = reference_forward(x, w)

    # Exact-f32 matmul path: tight parity with the PyTorch/f32 reference.
    out_f32 = optimization_forward(x, w, compute_dtype=jnp.float32)
    out_f32 = jax.block_until_ready(out_f32)
    assert out_f32.shape == (N, C, H, W)
    assert jnp.allclose(out_f32, ref, atol=1e-4, rtol=1e-4), "f32 path mismatch"

    # Default bf16 MXU path: full-rate MXU on v6e/v7x; residual + ReLU in f32,
    # so only the conv term carries bf16 rounding (looser tolerance expected).
    out_bf16 = optimization_forward(x, w)
    out_bf16 = jax.block_until_ready(out_bf16)
    assert out_bf16.shape == (N, C, H, W)
    assert jnp.allclose(out_bf16, ref, atol=5e-2, rtol=5e-2), "bf16 path mismatch"

    print("KERNEL_OK")
</pallas_src>

<mosaic_0001>
module attributes {stable_mosaic.version = 11 : i64} {
  func.func @dcsc_opt_kernel(%arg0: i32, %arg1: memref<2x10x8x384xf32, #tpu.memory_space<vmem>>, %arg2: memref<1152x128xf32, #tpu.memory_space<vmem>>, %arg3: memref<2x8x8x128xf32, #tpu.memory_space<vmem>>) attributes {dimension_semantics = [#tpu.dimension_semantics<parallel>], iteration_bounds = array<i64: 1>, scalar_prefetch = 0 : i64, scratch_operands = 0 : i64, tpu.core_type = #tpu.core_type<tc>, window_params = [{transform_indices = @transform_0, window_bounds = array<i64: 2, 10, 8, 384>}, {pipeline_mode = #tpu.pipeline_mode<synchronous>, transform_indices = @transform_1, window_bounds = array<i64: 1152, 128>}, {transform_indices = @transform_2, window_bounds = array<i64: 2, 8, 8, 128>}]} {
    %c0 = arith.constant 0 : index
    %c0_0 = arith.constant 0 : index
    %c0_1 = arith.constant 0 : index
    %c0_2 = arith.constant 0 : index
    %0 = vector.load %arg1[%c0, %c0_0, %c0_1, %c0_2] : memref<2x10x8x384xf32, #tpu.memory_space<vmem>>, vector<2x10x8x384xf32>
    %1 = vector.extract_strided_slice %0 {offsets = [0, 0, 0, 0], sizes = [2, 8, 8, 384], strides = [1, 1, 1, 1]} : vector<2x10x8x384xf32> to vector<2x8x8x384xf32>
    %2 = vector.extract_strided_slice %0 {offsets = [0, 1, 0, 0], sizes = [2, 8, 8, 384], strides = [1, 1, 1, 1]} : vector<2x10x8x384xf32> to vector<2x8x8x384xf32>
    %3 = vector.extract_strided_slice %0 {offsets = [0, 2, 0, 0], sizes = [2, 8, 8, 384], strides = [1, 1, 1, 1]} : vector<2x10x8x384xf32> to vector<2x8x8x384xf32>
    %4 = tpu.concatenate %1, %2, %3 in 3 : vector<2x8x8x384xf32>, vector<2x8x8x384xf32>, vector<2x8x8x384xf32> -> vector<2x8x8x1152xf32>
    %5 = vector.shape_cast %4 : vector<2x8x8x1152xf32> to vector<128x1152xf32>
    %c0_3 = arith.constant 0 : index
    %c0_4 = arith.constant 0 : index
    %6 = vector.load %arg2[%c0_3, %c0_4] : memref<1152x128xf32, #tpu.memory_space<vmem>>, vector<1152x128xf32>
    %cst = arith.constant dense<0.000000e+00> : vector<128x128xf32>
    %7 = tpu.matmul %5, %6, %cst {dimension_numbers = #tpu.dot_dimension_numbers<[1], [0], [0], [1], [0, 0, 1, 1], [], []>} : vector<128x1152xf32>, vector<1152x128xf32>, vector<128x128xf32> -> vector<128x128xf32>
    %8 = vector.extract_strided_slice %0 {offsets = [0, 1, 0, 128], sizes = [2, 8, 8, 128], strides = [1, 1, 1, 1]} : vector<2x10x8x384xf32> to vector<2x8x8x128xf32>
    %9 = vector.shape_cast %8 : vector<2x8x8x128xf32> to vector<128x128xf32>
    %10 = arith.addf %9, %7 : vector<128x128xf32>
    %cst_5 = arith.constant 0.000000e+00 : f32
    %11 = vector.broadcast %cst_5 : f32 to vector<128x128xf32>
    %12 = arith.maximumf %10, %11 : vector<128x128xf32>
    %13 = vector.shape_cast %12 : vector<128x128xf32> to vector<2x8x8x128xf32>
    %c0_6 = arith.constant 0 : index
    %c0_7 = arith.constant 0 : index
    %c0_8 = arith.constant 0 : index
    %c0_9 = arith.constant 0 : index
    %14 = vector.load %arg3[%c0_6, %c0_7, %c0_8, %c0_9] : memref<2x8x8x128xf32, #tpu.memory_space<vmem>>, vector<2x8x8x128xf32>
    tpu.vector_store %arg3[%c0_6, %c0_7, %c0_8, %c0_9], %13 {strides = array<i32>} : memref<2x8x8x128xf32, #tpu.memory_space<vmem>>, vector<2x8x8x128xf32>,
    return
  }
  func.func @transform_0(%arg0: i32) -> (i32, i32, i32, i32) {
    %c0_i32 = arith.constant 0 : i32
    %c0_i32_0 = arith.constant 0 : i32
    %c0_i32_1 = arith.constant 0 : i32
    %c0_i32_2 = arith.constant 0 : i32
    return %arg0, %c0_i32, %c0_i32_0, %c0_i32_1 : i32, i32, i32, i32
  }
  func.func @transform_1(%arg0: i32) -> (i32, i32) {
    %c0_i32 = arith.constant 0 : i32
    %c0_i32_0 = arith.constant 0 : i32
    %c0_i32_1 = arith.constant 0 : i32
    return %c0_i32, %c0_i32_0 : i32, i32
  }
  func.func @transform_2(%arg0: i32) -> (i32, i32, i32, i32) {
    %c0_i32 = arith.constant 0 : i32
    %c0_i32_0 = arith.constant 0 : i32
    %c0_i32_1 = arith.constant 0 : i32
    %c0_i32_2 = arith.constant 0 : i32
    return %arg0, %c0_i32, %c0_i32_0, %c0_i32_1 : i32, i32, i32, i32
  }
}

</mosaic_0001>

<llo_original>
// kernel: optimization_forward_nhwc.1
$region0: #{optimization_forward_nhwc.1}
  #allocation0 [shape = 'u32[]', space=smem, size = 0x4, offset = 0x4, fixed_abs, tag = 'smem constant byte address 0x4 - core index']
  #allocation1 [shape = 'u32[144,128]{1,0:T(1,128)}', space=vmem, size = 0x12000, scoped, tag = 'internal scratch']
  %s0 = inlined_call_operand.vmem [shape: f32[2,10,8,384], index: 0, kind: input, shape index: {}]
  %s1 = inlined_call_operand.vmem [shape: f32[1152,128], index: 1, kind: input, shape index: {}]
  %s2 = inlined_call_operand.hbm [shape: f32[2,8,8,128], index: 2, kind: output, shape index: {}]
  %s3 = sld [smem:[#allocation0]]
  $region18: #{optimization_forward_nhwc.1} parent=0
    _
  %s5 = ssub.s32 1, %s3
  %s6 = scalar_select 0, %s5, %s3
  $region1: #{optimization_forward_nhwc.1} parent=0
    #allocation2 [shape = 'u8[65536]{0}', space=vmem, size = 0x10000, scoped, tag = 'output window, operand 0, single buffered']
    #allocation3 [shape = 's32[1]{0}', space=sflag, size = 0x4, scoped, tag = 'scoped memory for optimization_forward_nhwc.1']
    %7 = vsyncpa [#allocation3], 0
    // Predicated region
    $region2: #{optimization_forward_nhwc.1} parent=1 // pred_check
      _
    $region3: #{optimization_forward_nhwc.1} parent=1 // pred_check_branch
      %9 = sbr.rel (0) target = $region5
    $region4: #{optimization_forward_nhwc.1} parent=1 // pred_region
      _
    $region5: #{optimization_forward_nhwc.1} parent=1 // pred_fallthru
      _
    // Predicated region
    $region6: #{optimization_forward_nhwc.1} parent=1 // pred_check
      _
    $region7: #{optimization_forward_nhwc.1} parent=1 // pred_check_branch
      %11 = sbr.rel (0) target = $region9
    $region8: #{optimization_forward_nhwc.1} parent=1 // pred_region
      _
    $region9: #{optimization_forward_nhwc.1} parent=1 // pred_fallthru
      _
    %v12 = vld [vmem:[%s0] sm:$0xff]
    %v13 = vld [vmem:[%s0 + $0x8] sm:$0xff]
    %v14 = vld [vmem:[%s0 + $0x10] sm:$0xff]
    %v15 = vld [vmem:[%s0 + $0x18] sm:$0xff]
    %v16 = vld [vmem:[%s0 + $0x20] sm:$0xff]
    %v17 = vld [vmem:[%s0 + $0x28] sm:$0xff]
    %v18 = vld [vmem:[%s0 + $0x30] sm:$0xff]
    %v19 = vld [vmem:[%s0 + $0x38] sm:$0xff]
    %v20 = vld [vmem:[%s0 + $0x40] sm:$0xff]
    %v21 = vld [vmem:[%s0 + $0x48] sm:$0xff]
    %v22 = vld [vmem:[%s0 + $0x50] sm:$0xff]
    %v23 = vld [vmem:[%s0 + $0x58] sm:$0xff]
    %v24 = vld [vmem:[%s0 + $0x60] sm:$0xff]
    %v25 = vld [vmem:[%s0 + $0x68] sm:$0xff]
    %v26 = vld [vmem:[%s0 + $0x70] sm:$0xff]
    %v27 = vld [vmem:[%s0 + $0x78] sm:$0xff]
    %v28 = vld [vmem:[%s0 + $0x80] sm:$0xff]
    %v29 = vld [vmem:[%s0 + $0x88] sm:$0xff]
    %v30 = vld [vmem:[%s0 + $0x90] sm:$0xff]
    %v31 = vld [vmem:[%s0 + $0x98] sm:$0xff]
    %v32 = vld [vmem:[%s0 + $0xa0] sm:$0xff]
    %v33 = vld [vmem:[%s0 + $0xa8] sm:$0xff]
    %v34 = vld [vmem:[%s0 + $0xb0] sm:$0xff]
    %v35 = vld [vmem:[%s0 + $0xb8] sm:$0xff]
    %v36 = vld [vmem:[%s0 + $0xc0] sm:$0xff]
    %v37 = vld [vmem:[%s0 + $0xc8] sm:$0xff]
    %v38 = vld [vmem:[%s0 + $0xd0] sm:$0xff]
    %v39 = vld [vmem:[%s0 + $0xd8] sm:$0xff]
    %v40 = vld [vmem:[%s0 + $0xe0] sm:$0xff]
    %v41 = vld [vmem:[%s0 + $0xe8] sm:$0xff]
    %v42 = vld [vmem:[%s0 + $0xf0] sm:$0xff]
    %v43 = vld [vmem:[%s0 + $0xf8] sm:$0xff]
    %v44 = vld [vmem:[%s0 + $0x100] sm:$0xff]
    %v45 = vld [vmem:[%s0 + $0x108] sm:$0xff]
    %v46 = vld [vmem:[%s0 + $0x110] sm:$0xff]
    %v47 = vld [vmem:[%s0 + $0x118] sm:$0xff]
    %v48 = vld [vmem:[%s0 + $0x120] sm:$0xff]
    %v49 = vld [vmem:[%s0 + $0x128] sm:$0xff]
    %v50 = vld [vmem:[%s0 + $0x130] sm:$0xff]
    %v51 = vld [vmem:[%s0 + $0x138] sm:$0xff]
    %v52 = vld [vmem:[%s0 + $0x140] sm:$0xff]
    %v53 = vld [vmem:[%s0 + $0x148] sm:$0xff]
    %v54 = vld [vmem:[%s0 + $0x150] sm:$0xff]
    %v55 = vld [vmem:[%s0 + $0x158] sm:$0xff]
    %v56 = vld [vmem:[%s0 + $0x160] sm:$0xff]
    %v57 = vld [vmem:[%s0 + $0x168] sm:$0xff]
    %v58 = vld [vmem:[%s0 + $0x170] sm:$0xff]
    %v59 = vld [vmem:[%s0 + $0x178] sm:$0xff]
    %v60 = vld [vmem:[%s0 + $0x180] sm:$0xff]
    %v61 = vld [vmem:[%s0 + $0x188] sm:$0xff]
    %v62 = vld [vmem:[%s0 + $0x190] sm:$0xff]
    %v63 = vld [vmem:[%s0 + $0x198] sm:$0xff]
    %v64 = vld [vmem:[%s0 + $0x1a0] sm:$0xff]
    %v65 = vld [vmem:[%s0 + $0x1a8] sm:$0xff]
    %v66 = vld [vmem:[%s0 + $0x1b0] sm:$0xff]
    %v67 = vld [vmem:[%s0 + $0x1b8] sm:$0xff]
    %v68 = vld [vmem:[%s0 + $0x1c0] sm:$0xff]
    %v69 = vld [vmem:[%s0 + $0x1c8] sm:$0xff]
    %v70 = vld [vmem:[%s0 + $0x1d0] sm:$0xff]
    %v71 = vld [vmem:[%s0 + $0x1d8] sm:$0xff]
    %v72 = vld [vmem:[%s1] sm:$0xff]
    %v73 = vld [vmem:[%s1 + $0x8] sm:$0xff]
    %v74 = vld [vmem:[%s1 + $0x10] sm:$0xff]
    %v75 = vld [vmem:[%s1 + $0x18] sm:$0xff]
    %v76 = vld [vmem:[%s1 + $0x20] sm:$0xff]
    %v77 = vld [vmem:[%s1 + $0x28] sm:$0xff]
    %v78 = vld [vmem:[%s1 + $0x30] sm:$0xff]
    %v79 = vld [vmem:[%s1 + $0x38] sm:$0xff]
    %v80 = vld [vmem:[%s1 + $0x40] sm:$0xff]
    %v81 = vld [vmem:[%s1 + $0x48] sm:$0xff]
    %v82 = vld [vmem:[%s1 + $0x50] sm:$0xff]
    %v83 = vld [vmem:[%s1 + $0x58] sm:$0xff]
    %v84 = vld [vmem:[%s1 + $0x60] sm:$0xff]
    %v85 = vld [vmem:[%s1 + $0x68] sm:$0xff]
    %v86 = vld [vmem:[%s1 + $0x70] sm:$0xff]
    %v87 = vld [vmem:[%s1 + $0x78] sm:$0xff]
    %v88 = vld [vmem:[%s1 + $0x80] sm:$0xff]
    %v89 = vld [vmem:[%s1 + $0x88] sm:$0xff]
    %v90 = vld [vmem:[%s1 + $0x90] sm:$0xff]
    %v91 = vld [vmem:[%s1 + $0x98] sm:$0xff]
    %v92 = vld [vmem:[%s1 + $0xa0] sm:$0xff]
    %v93 = vld [vmem:[%s1 + $0xa8] sm:$0xff]
    %v94 = vld [vmem:[%s1 + $0xb0] sm:$0xff]
    %v95 = vld [vmem:[%s1 + $0xb8] sm:$0xff]
    %v96 = vld [vmem:[%s1 + $0xc0] sm:$0xff]
    %v97 = vld [vmem:[%s1 + $0xc8] sm:$0xff]
    %v98 = vld [vmem:[%s1 + $0xd0] sm:$0xff]
    %v99 = vld [vmem:[%s1 + $0xd8] sm:$0xff]
    %v100 = vld [vmem:[%s1 + $0xe0] sm:$0xff]
    %v101 = vld [vmem:[%s1 + $0xe8] sm:$0xff]
    %v102 = vld [vmem:[%s1 + $0xf0] sm:$0xff]
    %v103 = vld [vmem:[%s1 + $0xf8] sm:$0xff]
    %v104 = vld [vmem:[%s1 + $0x100] sm:$0xff]
    %v105 = vld [vmem:[%s1 + $0x108] sm:$0xff]
    %v106 = vld [vmem:[%s1 + $0x110] sm:$0xff]
    %v107 = vld [vmem:[%s1 + $0x118] sm:$0xff]
    %v108 = vld [vmem:[%s1 + $0x120] sm:$0xff]
    %v109 = vld [vmem:[%s1 + $0x128] sm:$0xff]
    %v110 = vld [vmem:[%s1 + $0x130] sm:$0xff]
    %v111 = vld [vmem:[%s1 + $0x138] sm:$0xff]
    %v112 = vld [vmem:[%s1 + $0x140] sm:$0xff]
    %v113 = vld [vmem:[%s1 + $0x148] sm:$0xff]
    %v114 = vld [vmem:[%s1 + $0x150] sm:$0xff]
    %v115 = vld [vmem:[%s1 + $0x158] sm:$0xff]
    %v116 = vld [vmem:[%s1 + $0x160] sm:$0xff]
    %v117 = vld [vmem:[%s1 + $0x168] sm:$0xff]
    %v118 = vld [vmem:[%s1 + $0x170] sm:$0xff]
    %v119 = vld [vmem:[%s1 + $0x178] sm:$0xff]
    %v120 = vld [vmem:[%s1 + $0x180] sm:$0xff]
    %v121 = vld [vmem:[%s1 + $0x188] sm:$0xff]
    %v122 = vld [vmem:[%s1 + $0x190] sm:$0xff]
    %v123 = vld [vmem:[%s1 + $0x198] sm:$0xff]
    %v124 = vld [vmem:[%s1 + $0x1a0] sm:$0xff]
    %v125 = vld [vmem:[%s1 + $0x1a8] sm:$0xff]
    %v126 = vld [vmem:[%s1 + $0x1b0] sm:$0xff]
    %v127 = vld [vmem:[%s1 + $0x1b8] sm:$0xff]
    %v128 = vld [vmem:[%s1 + $0x1c0] sm:$0xff]
    %v129 = vld [vmem:[%s1 + $0x1c8] sm:$0xff]
    %v130 = vld [vmem:[%s1 + $0x1d0] sm:$0xff]
    %v131 = vld [vmem:[%s1 + $0x1d8] sm:$0xff]
    %v132 = vld [vmem:[%s1 + $0x1e0] sm:$0xff]
    %v133 = vld [vmem:[%s1 + $0x1e8] sm:$0xff]
    %v134 = vld [vmem:[%s1 + $0x1f0] sm:$0xff]
    %v135 = vld [vmem:[%s1 + $0x1f8] sm:$0xff]
    %v136 = vld [vmem:[%s1 + $0x200] sm:$0xff]
    %v137 = vld [vmem:[%s1 + $0x208] sm:$0xff]
    %v138 = vld [vmem:[%s1 + $0x210] sm:$0xff]
    %v139 = vld [vmem:[%s1 + $0x218] sm:$0xff]
    %v140 = vld [vmem:[%s1 + $0x220] sm:$0xff]
    %v141 = vld [vmem:[%s1 + $0x228] sm:$0xff]
    %v142 = vld [vmem:[%s1 + $0x230] sm:$0xff]
    %v143 = vld [vmem:[%s1 + $0x238] sm:$0xff]
    %v144 = vld [vmem:[%s1 + $0x240] sm:$0xff]
    %v145 = vld [vmem:[%s1 + $0x248] sm:$0xff]
    %v146 = vld [vmem:[%s1 + $0x250] sm:$0xff]
    %v147 = vld [vmem:[%s1 + $0x258] sm:$0xff]
    %v148 = vld [vmem:[%s1 + $0x260] sm:$0xff]
    %v149 = vld [vmem:[%s1 + $0x268] sm:$0xff]
    %v150 = vld [vmem:[%s1 + $0x270] sm:$0xff]
    %v151 = vld [vmem:[%s1 + $0x278] sm:$0xff]
    %v152 = vld [vmem:[%s1 + $0x280] sm:$0xff]
    %v153 = vld [vmem:[%s1 + $0x288] sm:$0xff]
    %v154 = vld [vmem:[%s1 + $0x290] sm:$0xff]
    %v155 = vld [vmem:[%s1 + $0x298] sm:$0xff]
    %v156 = vld [vmem:[%s1 + $0x2a0] sm:$0xff]
    %v157 = vld [vmem:[%s1 + $0x2a8] sm:$0xff]
    %v158 = vld [vmem:[%s1 + $0x2b0] sm:$0xff]
    %v159 = vld [vmem:[%s1 + $0x2b8] sm:$0xff]
    %v160 = vld [vmem:[%s1 + $0x2c0] sm:$0xff]
    %v161 = vld [vmem:[%s1 + $0x2c8] sm:$0xff]
    %v162 = vld [vmem:[%s1 + $0x2d0] sm:$0xff]
    %v163 = vld [vmem:[%s1 + $0x2d8] sm:$0xff]
    %v164 = vld [vmem:[%s1 + $0x2e0] sm:$0xff]
    %v165 = vld [vmem:[%s1 + $0x2e8] sm:$0xff]
    %v166 = vld [vmem:[%s1 + $0x2f0] sm:$0xff]
    %v167 = vld [vmem:[%s1 + $0x2f8] sm:$0xff]
    %v168 = vld [vmem:[%s1 + $0x300] sm:$0xff]
    %v169 = vld [vmem:[%s1 + $0x308] sm:$0xff]
    %v170 = vld [vmem:[%s1 + $0x310] sm:$0xff]
    %v171 = vld [vmem:[%s1 + $0x318] sm:$0xff]
    %v172 = vld [vmem:[%s1 + $0x320] sm:$0xff]
    %v173 = vld [vmem:[%s1 + $0x328] sm:$0xff]
    %v174 = vld [vmem:[%s1 + $0x330] sm:$0xff]
    %v175 = vld [vmem:[%s1 + $0x338] sm:$0xff]
    %v176 = vld [vmem:[%s1 + $0x340] sm:$0xff]
    %v177 = vld [vmem:[%s1 + $0x348] sm:$0xff]
    %v178 = vld [vmem:[%s1 + $0x350] sm:$0xff]
    %v179 = vld [vmem:[%s1 + $0x358] sm:$0xff]
    %v180 = vld [vmem:[%s1 + $0x360] sm:$0xff]
    %v181 = vld [vmem:[%s1 + $0x368] sm:$0xff]
    %v182 = vld [vmem:[%s1 + $0x370] sm:$0xff]
    %v183 = vld [vmem:[%s1 + $0x378] sm:$0xff]
    %v184 = vld [vmem:[%s1 + $0x380] sm:$0xff]
    %v185 = vld [vmem:[%s1 + $0x388] sm:$0xff]
    %v186 = vld [vmem:[%s1 + $0x390] sm:$0xff]
    %v187 = vld [vmem:[%s1 + $0x398] sm:$0xff]
    %v188 = vld [vmem:[%s1 + $0x3a0] sm:$0xff]
    %v189 = vld [vmem:[%s1 + $0x3a8] sm:$0xff]
    %v190 = vld [vmem:[%s1 + $0x3b0] sm:$0xff]
    %v191 = vld [vmem:[%s1 + $0x3b8] sm:$0xff]
    %v192 = vld [vmem:[%s1 + $0x3c0] sm:$0xff]
    %v193 = vld [vmem:[%s1 + $0x3c8] sm:$0xff]
    %v194 = vld [vmem:[%s1 + $0x3d0] sm:$0xff]
    %v195 = vld [vmem:[%s1 + $0x3d8] sm:$0xff]
    %v196 = vld [vmem:[%s1 + $0x3e0] sm:$0xff]
    %v197 = vld [vmem:[%s1 + $0x3e8] sm:$0xff]
    %v198 = vld [vmem:[%s1 + $0x3f0] sm:$0xff]
    %v199 = vld [vmem:[%s1 + $0x3f8] sm:$0xff]
    %v200 = vld [vmem:[%s1 + $0x400] sm:$0xff]
    %v201 = vld [vmem:[%s1 + $0x408] sm:$0xff]
    %v202 = vld [vmem:[%s1 + $0x410] sm:$0xff]
    %v203 = vld [vmem:[%s1 + $0x418] sm:$0xff]
    %v204 = vld [vmem:[%s1 + $0x420] sm:$0xff]
    %v205 = vld [vmem:[%s1 + $0x428] sm:$0xff]
    %v206 = vld [vmem:[%s1 + $0x430] sm:$0xff]
    %v207 = vld [vmem:[%s1 + $0x438] sm:$0xff]
    %v208 = vld [vmem:[%s1 + $0x440] sm:$0xff]
    %v209 = vld [vmem:[%s1 + $0x448] sm:$0xff]
    %v210 = vld [vmem:[%s1 + $0x450] sm:$0xff]
    %v211 = vld [vmem:[%s1 + $0x458] sm:$0xff]
    %v212 = vld [vmem:[%s1 + $0x460] sm:$0xff]
    %v213 = vld [vmem:[%s1 + $0x468] sm:$0xff]
    %v214 = vld [vmem:[%s1 + $0x470] sm:$0xff]
    %v215 = vld [vmem:[%s1 + $0x478] sm:$0xff]
    %216 = vmatprep.subr.mxu0 0.0
    %217 = vmatpush1.msra.mxu0 %v87
    %218 = vmatprep.subr.mxu0 0.0
    %219 = vmatpush1.msra.mxu0 %v86
    %220 = vmatprep.subr.mxu0 0.0
    %221 = vmatpush1.msra.mxu0 %v85
    %222 = vmatprep.subr.mxu0 0.0
    %223 = vmatpush1.msra.mxu0 %v84
    %224 = vmatprep.subr.mxu0 0.0
    %225 = vmatpush1.msra.mxu0 %v83
    %226 = vmatprep.subr.mxu0 0.0
    %227 = vmatpush1.msra.mxu0 %v82
    %228 = vmatprep.subr.mxu0 0.0
    %229 = vmatpush1.msra.mxu0 %v81
    %230 = vmatprep.subr.mxu0 0.0
    %231 = vmatpush1.msra.mxu0 %v80
    %232 = vmatprep.subr.mxu0 0.0
    %233 = vmatpush1.msra.mxu0 %v79
    %234 = vmatprep.subr.mxu0 0.0
    %235 = vmatpush1.msra.mxu0 %v78
    %236 = vmatprep.subr.mxu0 0.0
    %237 = vmatpush1.msra.mxu0 %v77
    %238 = vmatprep.subr.mxu0 0.0
    %239 = vmatpush1.msra.mxu0 %v76
    %240 = vmatprep.subr.mxu0 0.0
    %241 = vmatpush1.msra.mxu0 %v75
    %242 = vmatprep.subr.mxu0 0.0
    %243 = vmatpush1.msra.mxu0 %v74
    %244 = vmatprep.subr.mxu0 0.0
    %245 = vmatpush1.msra.mxu0 %v73
    %246 = vmatprep.subr.mxu0 0.0
    %247 = vmatpush1.msra.mxu0 %v72
    %248 = vmatprep.subr.mxu0 0.0
    %249 = vmatpush2.msra.mxu0 %v103
    %250 = vmatprep.subr.mxu0 0.0
    %251 = vmatpush2.msra.mxu0 %v102
    %252 = vmatprep.subr.mxu0 0.0
    %253 = vmatpush2.msra.mxu0 %v101
    %254 = vmatprep.subr.mxu0 0.0
    %255 = vmatpush2.msra.mxu0 %v100
    %256 = vmatprep.subr.mxu0 0.0
    %257 = vmatpush2.msra.mxu0 %v99
    %258 = vmatprep.subr.mxu0 0.0
    %259 = vmatpush2.msra.mxu0 %v98
    %260 = vmatprep.subr.mxu0 0.0
    %261 = vmatpush2.msra.mxu0 %v97
    %262 = vmatprep.subr.mxu0 0.0
    %263 = vmatpush2.msra.mxu0 %v96
    %264 = vmatprep.subr.mxu0 0.0
    %265 = vmatpush2.msra.mxu0 %v95
    %266 = vmatprep.subr.mxu0 0.0
    %267 = vmatpush2.msra.mxu0 %v94
    %268 = vmatprep.subr.mxu0 0.0
    %269 = vmatpush2.msra.mxu0 %v93
    %270 = vmatprep.subr.mxu0 0.0
    %271 = vmatpush2.msra.mxu0 %v92
    %272 = vmatprep.subr.mxu0 0.0
    %273 = vmatpush2.msra.mxu0 %v91
    %274 = vmatprep.subr.mxu0 0.0
    %275 = vmatpush2.msra.mxu0 %v90
    %276 = vmatprep.subr.mxu0 0.0
    %277 = vmatpush2.msra.mxu0 %v89
    %278 = vmatprep.subr.mxu0 0.0
    %279 = vmatpush2.msra.mxu0 %v88
    %280 = vmatprep.mubr.f32.mxu0 %v13
    %281 = vmatmul.mubr.f32.gmra.mxu0 %v12
    %v282 = vpop.f32.mrf.mxu0
    %v283 = vadd.f32 0.0, %v282
    %v284 = vpop.f32.mrf.mxu0
    %285 = vmatprep.mubr.f32.mxu0 %v16
    %286 = vmatmul.mubr.f32.gmra.mxu0 %v15
    %v287 = vpop.f32.mrf.mxu0
    %v288 = vadd.f32 0.0, %v287
    %v289 = vpop.f32.mrf.mxu0
    %290 = vmatprep.mubr.f32.mxu0 %v19
    %291 = vmatmul.mubr.f32.gmra.mxu0 %v18
    %v292 = vpop.f32.mrf.mxu0
    %v293 = vadd.f32 0.0, %v292
    %v294 = vpop.f32.mrf.mxu0
    %295 = vmatprep.mubr.f32.mxu0 %v22
    %296 = vmatmul.mubr.f32.gmra.mxu0 %v21
    %v297 = vpop.f32.mrf.mxu0
    %v298 = vadd.f32 0.0, %v297
    %v299 = vpop.f32.mrf.mxu0
    %300 = vmatprep.mubr.f32.mxu0 %v25
    %301 = vmatmul.mubr.f32.gmra.mxu0 %v24
    %v302 = vpop.f32.mrf.mxu0
    %v303 = vadd.f32 0.0, %v302
    %v304 = vpop.f32.mrf.mxu0
    %305 = vmatprep.mubr.f32.mxu0 %v28
    %306 = vmatmul.mubr.f32.gmra.mxu0 %v27
    %v307 = vpop.f32.mrf.mxu0
    %v308 = vadd.f32 0.0, %v307
    %v309 = vpop.f32.mrf.mxu0
    %310 = vmatprep.mubr.f32.mxu0 %v31
    %311 = vmatmul.mubr.f32.gmra.mxu0 %v30
    %v312 = vpop.f32.mrf.mxu0
    %v313 = vadd.f32 0.0, %v312
    %v314 = vpop.f32.mrf.mxu0
    %315 = vmatprep.mubr.f32.mxu0 %v34
    %316 = vmatmul.mubr.f32.gmra.mxu0 %v33
    %v317 = vpop.f32.mrf.mxu0
    %v318 = vadd.f32 0.0, %v317
    %v319 = vpop.f32.mrf.mxu0
    %320 = vmatprep.mubr.f32.mxu0 %v43
    %321 = vmatmul.mubr.f32.gmra.mxu0 %v42
    %v322 = vpop.f32.mrf.mxu0
    %v323 = vadd.f32 0.0, %v322
    %v324 = vpop.f32.mrf.mxu0
    %325 = vmatprep.mubr.f32.mxu0 %v46
    %326 = vmatmul.mubr.f32.gmra.mxu0 %v45
    %v327 = vpop.f32.mrf.mxu0
    %v328 = vadd.f32 0.0, %v327
    %v329 = vpop.f32.mrf.mxu0
    %330 = vmatprep.mubr.f32.mxu0 %v49
    %331 = vmatmul.mubr.f32.gmra.mxu0 %v48
    %v332 = vpop.f32.mrf.mxu0
    %v333 = vadd.f32 0.0, %v332
    %v334 = vpop.f32.mrf.mxu0
    %335 = vmatprep.mubr.f32.mxu0 %v52
    %336 = vmatmul.mubr.f32.gmra.mxu0 %v51
    %v337 = vpop.f32.mrf.mxu0
    %v338 = vadd.f32 0.0, %v337
    %v339 = vpop.f32.mrf.mxu0
    %340 = vmatprep.mubr.f32.mxu0 %v55
    %341 = vmatmul.mubr.f32.gmra.mxu0 %v54
    %v342 = vpop.f32.mrf.mxu0
    %v343 = vadd.f32 0.0, %v342
    %v344 = vpop.f32.mrf.mxu0
    %345 = vmatprep.mubr.f32.mxu0 %v58
    %346 = vmatmul.mubr.f32.gmra.mxu0 %v57
    %v347 = vpop.f32.mrf.mxu0
    %v348 = vadd.f32 0.0, %v347
    %v349 = vpop.f32.mrf.mxu0
    %350 = vmatprep.mubr.f32.mxu0 %v61
    %351 = vmatmul.mubr.f32.gmra.mxu0 %v60
    %v352 = vpop.f32.mrf.mxu0
    %v353 = vadd.f32 0.0, %v352
    %v354 = vpop.f32.mrf.mxu0
    %355 = vmatprep.mubr.f32.mxu0 %v64
    %356 = vmatmul.mubr.f32.gmra.mxu0 %v63
    %v357 = vpop.f32.mrf.mxu0
    %v358 = vadd.f32 0.0, %v357
    %v359 = vpop.f32.mrf.mxu0
    %360 = vdwg.mxu0
    %361 = vmatprep.subr.mxu0 0.0
    %362 = vmatpush1.msra.mxu0 %v119
    %363 = vmatprep.subr.mxu0 0.0
    %364 = vmatpush1.msra.mxu0 %v118
    %365 = vmatprep.subr.mxu0 0.0
    %366 = vmatpush1.msra.mxu0 %v117
    %367 = vmatprep.subr.mxu0 0.0
    %368 = vmatpush1.msra.mxu0 %v116
    %369 = vmatprep.subr.mxu0 0.0
    %370 = vmatpush1.msra.mxu0 %v115
    %371 = vmatprep.subr.mxu0 0.0
    %372 = vmatpush1.msra.mxu0 %v114
    %373 = vmatprep.subr.mxu0 0.0
    %374 = vmatpush1.msra.mxu0 %v113
    %375 = vmatprep.subr.mxu0 0.0
    %376 = vmatpush1.msra.mxu0 %v112
    %377 = vmatprep.subr.mxu0 0.0
    %378 = vmatpush1.msra.mxu0 %v111
    %379 = vmatprep.subr.mxu0 0.0
    %380 = vmatpush1.msra.mxu0 %v110
    %381 = vmatprep.subr.mxu0 0.0
    %382 = vmatpush1.msra.mxu0 %v109
    %383 = vmatprep.subr.mxu0 0.0
    %384 = vmatpush1.msra.mxu0 %v108
    %385 = vmatprep.subr.mxu0 0.0
    %386 = vmatpush1.msra.mxu0 %v107
    %387 = vmatprep.subr.mxu0 0.0
    %388 = vmatpush1.msra.mxu0 %v106
    %389 = vmatprep.subr.mxu0 0.0
    %390 = vmatpush1.msra.mxu0 %v105
    %391 = vmatprep.subr.mxu0 0.0
    %392 = vmatpush1.msra.mxu0 %v104
    %393 = vmatprep.subr.mxu0 0.0
    %394 = vmatpush2.msra.mxu0 %v135
    %395 = vmatprep.subr.mxu0 0.0
    %396 = vmatpush2.msra.mxu0 %v134
    %397 = vmatprep.subr.mxu0 0.0
    %398 = vmatpush2.msra.mxu0 %v133
    %399 = vmatprep.subr.mxu0 0.0
    %400 = vmatpush2.msra.mxu0 %v132
    %401 = vmatprep.subr.mxu0 0.0
    %402 = vmatpush2.msra.mxu0 %v131
    %403 = vmatprep.subr.mxu0 0.0
    %404 = vmatpush2.msra.mxu0 %v130
    %405 = vmatprep.subr.mxu0 0.0
    %406 = vmatpush2.msra.mxu0 %v129
    %407 = vmatprep.subr.mxu0 0.0
    %408 = vmatpush2.msra.mxu0 %v128
    %409 = vmatprep.subr.mxu0 0.0
    %410 = vmatpush2.msra.mxu0 %v127
    %411 = vmatprep.subr.mxu0 0.0
    %412 = vmatpush2.msra.mxu0 %v126
    %413 = vmatprep.subr.mxu0 0.0
    %414 = vmatpush2.msra.mxu0 %v125
    %415 = vmatprep.subr.mxu0 0.0
    %416 = vmatpush2.msra.mxu0 %v124
    %417 = vmatprep.subr.mxu0 0.0
    %418 = vmatpush2.msra.mxu0 %v123
    %419 = vmatprep.subr.mxu0 0.0
    %420 = vmatpush2.msra.mxu0 %v122
    %421 = vmatprep.subr.mxu0 0.0
    %422 = vmatpush2.msra.mxu0 %v121
    %423 = vmatprep.subr.mxu0 0.0
    %424 = vmatpush2.msra.mxu0 %v120
    %425 = vmatprep.mubr.f32.mxu0 %v15
    %426 = vmatmul.mubr.f32.gmra.mxu0 %v14
    %v427 = vpop.f32.mrf.mxu0
    %v428 = vadd.f32 %v283, %v427
    %v429 = vpop.f32.mrf.mxu0
    %430 = vmatprep.mubr.f32.mxu0 %v18
    %431 = vmatmul.mubr.f32.gmra.mxu0 %v17
    %v432 = vpop.f32.mrf.mxu0
    %v433 = vadd.f32 %v288, %v432
    %v434 = vpop.f32.mrf.mxu0
    %435 = vmatprep.mubr.f32.mxu0 %v21
    %436 = vmatmul.mubr.f32.gmra.mxu0 %v20
    %v437 = vpop.f32.mrf.mxu0
    %v438 = vadd.f32 %v293, %v437
    %v439 = vpop.f32.mrf.mxu0
    %440 = vmatprep.mubr.f32.mxu0 %v24
    %441 = vmatmul.mubr.f32.gmra.mxu0 %v23
    %v442 = vpop.f32.mrf.mxu0
    %v443 = vadd.f32 %v298, %v442
    %v444 = vpop.f32.mrf.mxu0
    %445 = vmatprep.mubr.f32.mxu0 %v27
    %446 = vmatmul.mubr.f32.gmra.mxu0 %v26
    %v447 = vpop.f32.mrf.mxu0
    %v448 = vadd.f32 %v303, %v447
    %v449 = vpop.f32.mrf.mxu0
    %450 = vmatprep.mubr.f32.mxu0 %v30
    %451 = vmatmul.mubr.f32.gmra.mxu0 %v29
    %v452 = vpop.f32.mrf.mxu0
    %v453 = vadd.f32 %v308, %v452
    %v454 = vpop.f32.mrf.mxu0
    %455 = vmatprep.mubr.f32.mxu0 %v33
    %456 = vmatmul.mubr.f32.gmra.mxu0 %v32
    %v457 = vpop.f32.mrf.mxu0
    %v458 = vadd.f32 %v313, %v457
    %v459 = vpop.f32.mrf.mxu0
    %460 = vmatprep.mubr.f32.mxu0 %v36
    %461 = vmatmul.mubr.f32.gmra.mxu0 %v35
    %v462 = vpop.f32.mrf.mxu0
    %v463 = vadd.f32 %v318, %v462
    %v464 = vpop.f32.mrf.mxu0
    %465 = vmatprep.mubr.f32.mxu0 %v45
    %466 = vmatmul.mubr.f32.gmra.mxu0 %v44
    %v467 = vpop.f32.mrf.mxu0
    %v468 = vadd.f32 %v323, %v467
    %v469 = vpop.f32.mrf.mxu0
    %470 = vmatprep.mubr.f32.mxu0 %v48
    %471 = vmatmul.mubr.f32.gmra.mxu0 %v47
    %v472 = vpop.f32.mrf.mxu0
    %v473 = vadd.f32 %v328, %v472
    %v474 = vpop.f32.mrf.mxu0
    %475 = vmatprep.mubr.f32.mxu0 %v51
    %476 = vmatmul.mubr.f32.gmra.mxu0 %v50
    %v477 = vpop.f32.mrf.mxu0
    %v478 = vadd.f32 %v333, %v477
    %v479 = vpop.f32.mrf.mxu0
    %480 = vmatprep.mubr.f32.mxu0 %v54
    %481 = vmatmul.mubr.f32.gmra.mxu0 %v53
    %v482 = vpop.f32.mrf.mxu0
    %v483 = vadd.f32 %v338, %v482
    %v484 = vpop.f32.mrf.mxu0
    %485 = vmatprep.mubr.f32.mxu0 %v57
    %486 = vmatmul.mubr.f32.gmra.mxu0 %v56
    %v487 = vpop.f32.mrf.mxu0
    %v488 = vadd.f32 %v343, %v487
    %v489 = vpop.f32.mrf.mxu0
    %490 = vmatprep.mubr.f32.mxu0 %v60
    %491 = vmatmul.mubr.f32.gmra.mxu0 %v59
    %v492 = vpop.f32.mrf.mxu0
    %v493 = vadd.f32 %v348, %v492
    %v494 = vpop.f32.mrf.mxu0
    %495 = vmatprep.mubr.f32.mxu0 %v63
    %496 = vmatmul.mubr.f32.gmra.mxu0 %v62
    %v497 = vpop.f32.mrf.mxu0
    %v498 = vadd.f32 %v353, %v497
    %v499 = vpop.f32.mrf.mxu0
    %500 = vmatprep.mubr.f32.mxu0 %v66
    %501 = vmatmul.mubr.f32.gmra.mxu0 %v65
    %v502 = vpop.f32.mrf.mxu0
    %v503 = vadd.f32 %v358, %v502
    %v504 = vpop.f32.mrf.mxu0
    %505 = vdwg.mxu0
    %506 = vmatprep.subr.mxu0 0.0
    %507 = vmatpush1.msra.mxu0 %v151
    %508 = vmatprep.subr.mxu0 0.0
    %509 = vmatpush1.msra.mxu0 %v150
    %510 = vmatprep.subr.mxu0 0.0
    %511 = vmatpush1.msra.mxu0 %v149
    %512 = vmatprep.subr.mxu0 0.0
    %513 = vmatpush1.msra.mxu0 %v148
    %514 = vmatprep.subr.mxu0 0.0
    %515 = vmatpush1.msra.mxu0 %v147
    %516 = vmatprep.subr.mxu0 0.0
    %517 = vmatpush1.msra.mxu0 %v146
    %518 = vmatprep.subr.mxu0 0.0
    %519 = vmatpush1.msra.mxu0 %v145
    %520 = vmatprep.subr.mxu0 0.0
    %521 = vmatpush1.msra.mxu0 %v144
    %522 = vmatprep.subr.mxu0 0.0
    %523 = vmatpush1.msra.mxu0 %v143
    %524 = vmatprep.subr.mxu0 0.0
    %525 = vmatpush1.msra.mxu0 %v142
    %526 = vmatprep.subr.mxu0 0.0
    %527 = vmatpush1.msra.mxu0 %v141
    %528 = vmatprep.subr.mxu0 0.0
    %529 = vmatpush1.msra.mxu0 %v140
    %530 = vmatprep.subr.mxu0 0.0
    %531 = vmatpush1.msra.mxu0 %v139
    %532 = vmatprep.subr.mxu0 0.0
    %533 = vmatpush1.msra.mxu0 %v138
    %534 = vmatprep.subr.mxu0 0.0
    %535 = vmatpush1.msra.mxu0 %v137
    %536 = vmatprep.subr.mxu0 0.0
    %537 = vmatpush1.msra.mxu0 %v136
    %538 = vmatprep.subr.mxu0 0.0
    %539 = vmatpush2.msra.mxu0 %v167
    %540 = vmatprep.subr.mxu0 0.0
    %541 = vmatpush2.msra.mxu0 %v166
    %542 = vmatprep.subr.mxu0 0.0
    %543 = vmatpush2.msra.mxu0 %v165
    %544 = vmatprep.subr.mxu0 0.0
    %545 = vmatpush2.msra.mxu0 %v164
    %546 = vmatprep.subr.mxu0 0.0
    %547 = vmatpush2.msra.mxu0 %v163
    %548 = vmatprep.subr.mxu0 0.0
    %549 = vmatpush2.msra.mxu0 %v162
    %550 = vmatprep.subr.mxu0 0.0
    %551 = vmatpush2.msra.mxu0 %v161
    %552 = vmatprep.subr.mxu0 0.0
    %553 = vmatpush2.msra.mxu0 %v160
    %554 = vmatprep.subr.mxu0 0.0
    %555 = vmatpush2.msra.mxu0 %v159
    %556 = vmatprep.subr.mxu0 0.0
    %557 = vmatpush2.msra.mxu0 %v158
    %558 = vmatprep.subr.mxu0 0.0
    %559 = vmatpush2.msra.mxu0 %v157
    %560 = vmatprep.subr.mxu0 0.0
    %561 = vmatpush2.msra.mxu0 %v156
    %562 = vmatprep.subr.mxu0 0.0
    %563 = vmatpush2.msra.mxu0 %v155
    %564 = vmatprep.subr.mxu0 0.0
    %565 = vmatpush2.msra.mxu0 %v154
    %566 = vmatprep.subr.mxu0 0.0
    %567 = vmatpush2.msra.mxu0 %v153
    %568 = vmatprep.subr.mxu0 0.0
    %569 = vmatpush2.msra.mxu0 %v152
    %570 = vmatprep.mubr.f32.mxu0 %v17
    %571 = vmatmul.mubr.f32.gmra.mxu0 %v16
    %v572 = vpop.f32.mrf.mxu0
    %v573 = vadd.f32 %v428, %v572
    %v574 = vpop.f32.mrf.mxu0
    %575 = vmatprep.mubr.f32.mxu0 %v20
    %576 = vmatmul.mubr.f32.gmra.mxu0 %v19
    %v577 = vpop.f32.mrf.mxu0
    %v578 = vadd.f32 %v433, %v577
    %v579 = vpop.f32.mrf.mxu0
    %580 = vmatprep.mubr.f32.mxu0 %v23
    %581 = vmatmul.mubr.f32.gmra.mxu0 %v22
    %v582 = vpop.f32.mrf.mxu0
    %v583 = vadd.f32 %v438, %v582
    %v584 = vpop.f32.mrf.mxu0
    %585 = vmatprep.mubr.f32.mxu0 %v26
    %586 = vmatmul.mubr.f32.gmra.mxu0 %v25
    %v587 = vpop.f32.mrf.mxu0
    %v588 = vadd.f32 %v443, %v587
    %v589 = vpop.f32.mrf.mxu0
    %590 = vmatprep.mubr.f32.mxu0 %v29
    %591 = vmatmul.mubr.f32.gmra.mxu0 %v28
    %v592 = vpop.f32.mrf.mxu0
    %v593 = vadd.f32 %v448, %v592
    %v594 = vpop.f32.mrf.mxu0
    %595 = vmatprep.mubr.f32.mxu0 %v32
    %596 = vmatmul.mubr.f32.gmra.mxu0 %v31
    %v597 = vpop.f32.mrf.mxu0
    %v598 = vadd.f32 %v453, %v597
    %v599 = vpop.f32.mrf.mxu0
    %600 = vmatprep.mubr.f32.mxu0 %v35
    %601 = vmatmul.mubr.f32.gmra.mxu0 %v34
    %v602 = vpop.f32.mrf.mxu0
    %v603 = vadd.f32 %v458, %v602
    %v604 = vpop.f32.mrf.mxu0
    %605 = vmatprep.mubr.f32.mxu0 %v38
    %606 = vmatmul.mubr.f32.gmra.mxu0 %v37
    %v607 = vpop.f32.mrf.mxu0
    %v608 = vadd.f32 %v463, %v607
    %v609 = vpop.f32.mrf.mxu0
    %610 = vmatprep.mubr.f32.mxu0 %v47
    %611 = vmatmul.mubr.f32.gmra.mxu0 %v46
    %v612 = vpop.f32.mrf.mxu0
    %v613 = vadd.f32 %v468, %v612
    %v614 = vpop.f32.mrf.mxu0
    %615 = vmatprep.mubr.f32.mxu0 %v50
    %616 = vmatmul.mubr.f32.gmra.mxu0 %v49
    %v617 = vpop.f32.mrf.mxu0
    %v618 = vadd.f32 %v473, %v617
    %v619 = vpop.f32.mrf.mxu0
    %620 = vmatprep.mubr.f32.mxu0 %v53
    %621 = vmatmul.mubr.f32.gmra.mxu0 %v52
    %v622 = vpop.f32.mrf.mxu0
    %v623 = vadd.f32 %v478, %v622
    %v624 = vpop.f32.mrf.mxu0
    %625 = vmatprep.mubr.f32.mxu0 %v56
    %626 = vmatmul.mubr.f32.gmra.mxu0 %v55
    %v627 = vpop.f32.mrf.mxu0
    %v628 = vadd.f32 %v483, %v627
    %v629 = vpop.f32.mrf.mxu0
    %630 = vmatprep.mubr.f32.mxu0 %v59
    %631 = vmatmul.mubr.f32.gmra.mxu0 %v58
    %v632 = vpop.f32.mrf.mxu0
    %v633 = vadd.f32 %v488, %v632
    %v634 = vpop.f32.mrf.mxu0
    %635 = vmatprep.mubr.f32.mxu0 %v62
    %636 = vmatmul.mubr.f32.gmra.mxu0 %v61
    %v637 = vpop.f32.mrf.mxu0
    %v638 = vadd.f32 %v493, %v637
    %v639 = vpop.f32.mrf.mxu0
    %640 = vmatprep.mubr.f32.mxu0 %v65
    %641 = vmatmul.mubr.f32.gmra.mxu0 %v64
    %v642 = vpop.f32.mrf.mxu0
    %v643 = vadd.f32 %v498, %v642
    %v644 = vpop.f32.mrf.mxu0
    %645 = vmatprep.mubr.f32.mxu0 %v68
    %646 = vmatmul.mubr.f32.gmra.mxu0 %v67
    %v647 = vpop.f32.mrf.mxu0
    %v648 = vadd.f32 %v503, %v647
    %v649 = vpop.f32.mrf.mxu0
    %650 = vdwg.mxu0
    %651 = vmatprep.subr.mxu0 0.0
    %652 = vmatpush1.msra.mxu0 %v183
    %653 = vmatprep.subr.mxu0 0.0
    %654 = vmatpush1.msra.mxu0 %v182
    %655 = vmatprep.subr.mxu0 0.0
    %656 = vmatpush1.msra.mxu0 %v181
    %657 = vmatprep.subr.mxu0 0.0
    %658 = vmatpush1.msra.mxu0 %v180
    %659 = vmatprep.subr.mxu0 0.0
    %660 = vmatpush1.msra.mxu0 %v179
    %661 = vmatprep.subr.mxu0 0.0
    %662 = vmatpush1.msra.mxu0 %v178
    %663 = vmatprep.subr.mxu0 0.0
    %664 = vmatpush1.msra.mxu0 %v177
    %665 = vmatprep.subr.mxu0 0.0
    %666 = vmatpush1.msra.mxu0 %v176
    %667 = vmatprep.subr.mxu0 0.0
    %668 = vmatpush1.msra.mxu0 %v175
    %669 = vmatprep.subr.mxu0 0.0
    %670 = vmatpush1.msra.mxu0 %v174
    %671 = vmatprep.subr.mxu0 0.0
    %672 = vmatpush1.msra.mxu0 %v173
    %673 = vmatprep.subr.mxu0 0.0
    %674 = vmatpush1.msra.mxu0 %v172
    %675 = vmatprep.subr.mxu0 0.0
    %676 = vmatpush1.msra.mxu0 %v171
    %677 = vmatprep.subr.mxu0 0.0
    %678 = vmatpush1.msra.mxu0 %v170
    %679 = vmatprep.subr.mxu0 0.0
    %680 = vmatpush1.msra.mxu0 %v169
    %681 = vmatprep.subr.mxu0 0.0
    %682 = vmatpush1.msra.mxu0 %v168
    %683 = vmatprep.subr.mxu0 0.0
    %684 = vmatpush2.msra.mxu0 %v199
    %685 = vmatprep.subr.mxu0 0.0
    %686 = vmatpush2.msra.mxu0 %v198
    %687 = vmatprep.subr.mxu0 0.0
    %688 = vmatpush2.msra.mxu0 %v197
    %689 = vmatprep.subr.mxu0 0.0
    %690 = vmatpush2.msra.mxu0 %v196
    %691 = vmatprep.subr.mxu0 0.0
    %692 = vmatpush2.msra.mxu0 %v195
    %693 = vmatprep.subr.mxu0 0.0
    %694 = vmatpush2.msra.mxu0 %v194
    %695 = vmatprep.subr.mxu0 0.0
    %696 = vmatpush2.msra.mxu0 %v193
    %697 = vmatprep.subr.mxu0 0.0
    %698 = vmatpush2.msra.mxu0 %v192
    %699 = vmatprep.subr.mxu0 0.0
    %700 = vmatpush2.msra.mxu0 %v191
    %701 = vmatprep.subr.mxu0 0.0
    %702 = vmatpush2.msra.mxu0 %v190
    %703 = vmatprep.subr.mxu0 0.0
    %704 = vmatpush2.msra.mxu0 %v189
    %705 = vmatprep.subr.mxu0 0.0
    %706 = vmatpush2.msra.mxu0 %v188
    %707 = vmatprep.subr.mxu0 0.0
    %708 = vmatpush2.msra.mxu0 %v187
    %709 = vmatprep.subr.mxu0 0.0
    %710 = vmatpush2.msra.mxu0 %v186
    %711 = vmatprep.subr.mxu0 0.0
    %712 = vmatpush2.msra.mxu0 %v185
    %713 = vmatprep.subr.mxu0 0.0
    %714 = vmatpush2.msra.mxu0 %v184
    %715 = vmatprep.mubr.f32.mxu0 %v19
    %716 = vmatmul.mubr.f32.gmra.mxu0 %v18
    %v717 = vpop.f32.mrf.mxu0
    %v718 = vadd.f32 %v573, %v717
    %v719 = vpop.f32.mrf.mxu0
    %720 = vmatprep.mubr.f32.mxu0 %v22
    %721 = vmatmul.mubr.f32.gmra.mxu0 %v21
    %v722 = vpop.f32.mrf.mxu0
    %v723 = vadd.f32 %v578, %v722
    %v724 = vpop.f32.mrf.mxu0
    %725 = vmatprep.mubr.f32.mxu0 %v25
    %726 = vmatmul.mubr.f32.gmra.mxu0 %v24
    %v727 = vpop.f32.mrf.mxu0
    %v728 = vadd.f32 %v583, %v727
    %v729 = vpop.f32.mrf.mxu0
    %730 = vmatprep.mubr.f32.mxu0 %v28
    %731 = vmatmul.mubr.f32.gmra.mxu0 %v27
    %v732 = vpop.f32.mrf.mxu0
    %v733 = vadd.f32 %v588, %v732
    %v734 = vpop.f32.mrf.mxu0
    %735 = vmatprep.mubr.f32.mxu0 %v31
    %736 = vmatmul.mubr.f32.gmra.mxu0 %v30
    %v737 = vpop.f32.mrf.mxu0
    %v738 = vadd.f32 %v593, %v737
    %v739 = vpop.f32.mrf.mxu0
    %740 = vmatprep.mubr.f32.mxu0 %v34
    %741 = vmatmul.mubr.f32.gmra.mxu0 %v33
    %v742 = vpop.f32.mrf.mxu0
    %v743 = vadd.f32 %v598, %v742
    %v744 = vpop.f32.mrf.mxu0
    %745 = vmatprep.mubr.f32.mxu0 %v37
    %746 = vmatmul.mubr.f32.gmra.mxu0 %v36
    %v747 = vpop.f32.mrf.mxu0
    %v748 = vadd.f32 %v603, %v747
    %v749 = vpop.f32.mrf.mxu0
    %750 = vmatprep.mubr.f32.mxu0 %v40
    %751 = vmatmul.mubr.f32.gmra.mxu0 %v39
    %v752 = vpop.f32.mrf.mxu0
    %v753 = vadd.f32 %v608, %v752
    %v754 = vpop.f32.mrf.mxu0
    %755 = vmatprep.mubr.f32.mxu0 %v49
    %756 = vmatmul.mubr.f32.gmra.mxu0 %v48
    %v757 = vpop.f32.mrf.mxu0
    %v758 = vadd.f32 %v613, %v757
    %v759 = vpop.f32.mrf.mxu0
    %760 = vmatprep.mubr.f32.mxu0 %v52
    %761 = vmatmul.mubr.f32.gmra.mxu0 %v51
    %v762 = vpop.f32.mrf.mxu0
    %v763 = vadd.f32 %v618, %v762
    %v764 = vpop.f32.mrf.mxu0
    %765 = vmatprep.mubr.f32.mxu0 %v55
    %766 = vmatmul.mubr.f32.gmra.mxu0 %v54
    %v767 = vpop.f32.mrf.mxu0
    %v768 = vadd.f32 %v623, %v767
    %v769 = vpop.f32.mrf.mxu0
    %770 = vmatprep.mubr.f32.mxu0 %v58
    %771 = vmatmul.mubr.f32.gmra.mxu0 %v57
    %v772 = vpop.f32.mrf.mxu0
    %v773 = vadd.f32 %v628, %v772
    %v774 = vpop.f32.mrf.mxu0
    %775 = vmatprep.mubr.f32.mxu0 %v61
    %776 = vmatmul.mubr.f32.gmra.mxu0 %v60
    %v777 = vpop.f32.mrf.mxu0
    %v778 = vadd.f32 %v633, %v777
    %v779 = vpop.f32.mrf.mxu0
    %780 = vmatprep.mubr.f32.mxu0 %v64
    %781 = vmatmul.mubr.f32.gmra.mxu0 %v63
    %v782 = vpop.f32.mrf.mxu0
    %v783 = vadd.f32 %v638, %v782
    %v784 = vpop.f32.mrf.mxu0
    %785 = vmatprep.mubr.f32.mxu0 %v67
    %786 = vmatmul.mubr.f32.gmra.mxu0 %v66
    %v787 = vpop.f32.mrf.mxu0
    %v788 = vadd.f32 %v643, %v787
    %v789 = vpop.f32.mrf.mxu0
    %790 = vmatprep.mubr.f32.mxu0 %v70
    %791 = vmatmul.mubr.f32.gmra.mxu0 %v69
    %v792 = vpop.f32.mrf.mxu0
    %v793 = vadd.f32 %v648, %v792
    %v794 = vpop.f32.mrf.mxu0
    %795 = vdwg.mxu0
    %796 = vmatprep.subr.mxu0 0.0
    %797 = vmatpush1.msra.mxu0 %v215
    %798 = vmatprep.subr.mxu0 0.0
    %799 = vmatpush1.msra.mxu0 %v214
    %800 = vmatprep.subr.mxu0 0.0
    %801 = vmatpush1.msra.mxu0 %v213
    %802 = vmatprep.subr.mxu0 0.0
    %803 = vmatpush1.msra.mxu0 %v212
    %804 = vmatprep.subr.mxu0 0.0
    %805 = vmatpush1.msra.mxu0 %v211
    %806 = vmatprep.subr.mxu0 0.0
    %807 = vmatpush1.msra.mxu0 %v210
    %808 = vmatprep.subr.mxu0 0.0
    %809 = vmatpush1.msra.mxu0 %v209
    %810 = vmatprep.subr.mxu0 0.0
    %811 = vmatpush1.msra.mxu0 %v208
    %812 = vmatprep.subr.mxu0 0.0
    %813 = vmatpush1.msra.mxu0 %v207
    %814 = vmatprep.subr.mxu0 0.0
    %815 = vmatpush1.msra.mxu0 %v206
    %816 = vmatprep.subr.mxu0 0.0
    %817 = vmatpush1.msra.mxu0 %v205
    %818 = vmatprep.subr.mxu0 0.0
    %819 = vmatpush1.msra.mxu0 %v204
    %820 = vmatprep.subr.mxu0 0.0
    %821 = vmatpush1.msra.mxu0 %v203
    %822 = vmatprep.subr.mxu0 0.0
    %823 = vmatpush1.msra.mxu0 %v202
    %824 = vmatprep.subr.mxu0 0.0
    %825 = vmatpush1.msra.mxu0 %v201
    %826 = vmatprep.subr.mxu0 0.0
    %827 = vmatpush1.msra.mxu0 %v200
    %828 = vmatprep.subr.mxu0 0.0
    %829 = vmatpush2.msra.mxu0 0.0
    %830 = vmatprep.subr.mxu0 0.0
    %831 = vmatpush2.msra.mxu0 0.0
    %832 = vmatprep.subr.mxu0 0.0
    %833 = vmatpush2.msra.mxu0 0.0
    %834 = vmatprep.subr.mxu0 0.0
    %835 = vmatpush2.msra.mxu0 0.0
    %836 = vmatprep.subr.mxu0 0.0
    %837 = vmatpush2.msra.mxu0 0.0
    %838 = vmatprep.subr.mxu0 0.0
    %839 = vmatpush2.msra.mxu0 0.0
    %840 = vmatprep.subr.mxu0 0.0
    %841 = vmatpush2.msra.mxu0 0.0
    %842 = vmatprep.subr.mxu0 0.0
    %843 = vmatpush2.msra.mxu0 0.0
    %844 = vmatprep.subr.mxu0 0.0
    %845 = vmatpush2.msra.mxu0 0.0
    %846 = vmatprep.subr.mxu0 0.0
    %847 = vmatpush2.msra.mxu0 0.0
    %848 = vmatprep.subr.mxu0 0.0
    %849 = vmatpush2.msra.mxu0 0.0
    %850 = vmatprep.subr.mxu0 0.0
    %851 = vmatpush2.msra.mxu0 0.0
    %852 = vmatprep.subr.mxu0 0.0
    %853 = vmatpush2.msra.mxu0 0.0
    %854 = vmatprep.subr.mxu0 0.0
    %855 = vmatpush2.msra.mxu0 0.0
    %856 = vmatprep.subr.mxu0 0.0
    %857 = vmatpush2.msra.mxu0 0.0
    %858 = vmatprep.subr.mxu0 0.0
    %859 = vmatpush2.msra.mxu0 0.0
    %860 = vmatprep.mubr.f32.mxu0 0.0
    %861 = vmatmul.mubr.f32.gmra.mxu0 %v20
    %v862 = vpop.f32.mrf.mxu0
    %v863 = vadd.f32 %v718, %v862
    %v864 = vpop.f32.mrf.mxu0
    %865 = vmatprep.mubr.f32.mxu0 0.0
    %866 = vmatmul.mubr.f32.gmra.mxu0 %v23
    %v867 = vpop.f32.mrf.mxu0
    %v868 = vadd.f32 %v723, %v867
    %v869 = vpop.f32.mrf.mxu0
    %870 = vmatprep.mubr.f32.mxu0 0.0
    %871 = vmatmul.mubr.f32.gmra.mxu0 %v26
    %v872 = vpop.f32.mrf.mxu0
    %v873 = vadd.f32 %v728, %v872
    %v874 = vpop.f32.mrf.mxu0
    %875 = vmatprep.mubr.f32.mxu0 0.0
    %876 = vmatmul.mubr.f32.gmra.mxu0 %v29
    %v877 = vpop.f32.mrf.mxu0
    %v878 = vadd.f32 %v733, %v877
    %v879 = vpop.f32.mrf.mxu0
    %880 = vmatprep.mubr.f32.mxu0 0.0
    %881 = vmatmul.mubr.f32.gmra.mxu0 %v32
    %v882 = vpop.f32.mrf.mxu0
    %v883 = vadd.f32 %v738, %v882
    %v884 = vpop.f32.mrf.mxu0
    %885 = vmatprep.mubr.f32.mxu0 0.0
    %886 = vmatmul.mubr.f32.gmra.mxu0 %v35
    %v887 = vpop.f32.mrf.mxu0
    %v888 = vadd.f32 %v743, %v887
    %v889 = vpop.f32.mrf.mxu0
    %890 = vmatprep.mubr.f32.mxu0 0.0
    %891 = vmatmul.mubr.f32.gmra.mxu0 %v38
    %v892 = vpop.f32.mrf.mxu0
    %v893 = vadd.f32 %v748, %v892
    %v894 = vpop.f32.mrf.mxu0
    %895 = vmatprep.mubr.f32.mxu0 0.0
    %896 = vmatmul.mubr.f32.gmra.mxu0 %v41
    %v897 = vpop.f32.mrf.mxu0
    %v898 = vadd.f32 %v753, %v897
    %v899 = vpop.f32.mrf.mxu0
    %900 = vmatprep.mubr.f32.mxu0 0.0
    %901 = vmatmul.mubr.f32.gmra.mxu0 %v50
    %v902 = vpop.f32.mrf.mxu0
    %v903 = vadd.f32 %v758, %v902
    %v904 = vpop.f32.mrf.mxu0
    %905 = vmatprep.mubr.f32.mxu0 0.0
    %906 = vmatmul.mubr.f32.gmra.mxu0 %v53
    %v907 = vpop.f32.mrf.mxu0
    %v908 = vadd.f32 %v763, %v907
    %v909 = vpop.f32.mrf.mxu0
    %910 = vmatprep.mubr.f32.mxu0 0.0
    %911 = vmatmul.mubr.f32.gmra.mxu0 %v56
    %v912 = vpop.f32.mrf.mxu0
    %v913 = vadd.f32 %v768, %v912
    %v914 = vpop.f32.mrf.mxu0
    %915 = vmatprep.mubr.f32.mxu0 0.0
    %916 = vmatmul.mubr.f32.gmra.mxu0 %v59
    %v917 = vpop.f32.mrf.mxu0
    %v918 = vadd.f32 %v773, %v917
    %v919 = vpop.f32.mrf.mxu0
    %920 = vmatprep.mubr.f32.mxu0 0.0
    %921 = vmatmul.mubr.f32.gmra.mxu0 %v62
    %v922 = vpop.f32.mrf.mxu0
    %v923 = vadd.f32 %v778, %v922
    %v924 = vpop.f32.mrf.mxu0
    %925 = vmatprep.mubr.f32.mxu0 0.0
    %926 = vmatmul.mubr.f32.gmra.mxu0 %v65
    %v927 = vpop.f32.mrf.mxu0
    %v928 = vadd.f32 %v783, %v927
    %v929 = vpop.f32.mrf.mxu0
    %930 = vmatprep.mubr.f32.mxu0 0.0
    %931 = vmatmul.mubr.f32.gmra.mxu0 %v68
    %v932 = vpop.f32.mrf.mxu0
    %v933 = vadd.f32 %v788, %v932
    %v934 = vpop.f32.mrf.mxu0
    %935 = vmatprep.mubr.f32.mxu0 0.0
    %936 = vmatmul.mubr.f32.gmra.mxu0 %v71
    %v937 = vpop.f32.mrf.mxu0
    %v938 = vadd.f32 %v793, %v937
    %v939 = vpop.f32.mrf.mxu0
    %940 = vdwg.mxu0
    %v941 = vadd.f32 %v16, %v863
    %v942 = vadd.f32 %v19, %v868
    %v943 = vadd.f32 %v22, %v873
    %v944 = vadd.f32 %v25, %v878
    %v945 = vadd.f32 %v28, %v883
    %v946 = vadd.f32 %v31, %v888
    %v947 = vadd.f32 %v34, %v893
    %v948 = vadd.f32 %v37, %v898
    %v949 = vadd.f32 %v46, %v903
    %v950 = vadd.f32 %v49, %v908
    %v951 = vadd.f32 %v52, %v913
    %v952 = vadd.f32 %v55, %v918
    %v953 = vadd.f32 %v58, %v923
    %v954 = vadd.f32 %v61, %v928
    %v955 = vadd.f32 %v64, %v933
    %v956 = vadd.f32 %v67, %v938
    %v957 = vmax.f32 %v941, 0.0
    %v958 = vmax.f32 %v942, 0.0
    %v959 = vmax.f32 %v943, 0.0
    %v960 = vmax.f32 %v944, 0.0
    %v961 = vmax.f32 %v945, 0.0
    %v962 = vmax.f32 %v946, 0.0
    %v963 = vmax.f32 %v947, 0.0
    %v964 = vmax.f32 %v948, 0.0
    %v965 = vmax.f32 %v949, 0.0
    %v966 = vmax.f32 %v950, 0.0
    %v967 = vmax.f32 %v951, 0.0
    %v968 = vmax.f32 %v952, 0.0
    %v969 = vmax.f32 %v953, 0.0
    %v970 = vmax.f32 %v954, 0.0
    %v971 = vmax.f32 %v955, 0.0
    %v972 = vmax.f32 %v956, 0.0
    %973 = vst [vmem:[#allocation2] sm:$0xff] %v957
    %974 = vst [vmem:[#allocation2 + $0x8] sm:$0xff] %v958
    %975 = vst [vmem:[#allocation2 + $0x10] sm:$0xff] %v959
    %976 = vst [vmem:[#allocation2 + $0x18] sm:$0xff] %v960
    %977 = vst [vmem:[#allocation2 + $0x20] sm:$0xff] %v961
    %978 = vst [vmem:[#allocation2 + $0x28] sm:$0xff] %v962
    %979 = vst [vmem:[#allocation2 + $0x30] sm:$0xff] %v963
    %980 = vst [vmem:[#allocation2 + $0x38] sm:$0xff] %v964
    %981 = vst [vmem:[#allocation2 + $0x40] sm:$0xff] %v965
    %982 = vst [vmem:[#allocation2 + $0x48] sm:$0xff] %v966
    %983 = vst [vmem:[#allocation2 + $0x50] sm:$0xff] %v967
    %984 = vst [vmem:[#allocation2 + $0x58] sm:$0xff] %v968
    %985 = vst [vmem:[#allocation2 + $0x60] sm:$0xff] %v969
    %986 = vst [vmem:[#allocation2 + $0x68] sm:$0xff] %v970
    %987 = vst [vmem:[#allocation2 + $0x70] sm:$0xff] %v971
    %988 = vst [vmem:[#allocation2 + $0x78] sm:$0xff] %v972
    // Predicated region
    $region10: #{optimization_forward_nhwc.1} parent=1 // pred_check
      _
    $region11: #{optimization_forward_nhwc.1} parent=1 // pred_check_branch
      %990 = sbr.rel (0) target = $region13
    $region12: #{optimization_forward_nhwc.1} parent=1 // pred_region
      %s992 = ssub.s32 2048, 2048
      %993 = vsyncadd [#allocation3], %s992
      %s994 = sshll.u32 [#allocation2], 4
      %s995 = int_to_ptr.vmem [resolvable:$true] %s994
      %1000 = dma.vmem_to_hbm [thread:$0]  %s995, 2048, %s2, [#allocation3], 128, 128, 8
    $region13: #{optimization_forward_nhwc.1} parent=1 // pred_fallthru
      _
    // Predicated region
    $region14: #{optimization_forward_nhwc.1} parent=1 // pred_check
      _
    $region15: #{optimization_forward_nhwc.1} parent=1 // pred_check_branch
      %1002 = sbr.rel (0) target = $region17
    $region16: #{optimization_forward_nhwc.1} parent=1 // pred_region
      %1003 = dma.done [#allocation3], 2048
    $region17: #{optimization_forward_nhwc.1} parent=1 // pred_fallthru
      _
    %1004 = vsyncpa [#allocation3], 1

</llo_original>
